<compile_context>
chip_gen: v6e
topology: v6e:2x2x1
jax: 0.10.0
libtpu: 0.0.40
codegen_flags: <defaults>
</compile_context>

<pallas_src>
import functools

import jax
import jax.numpy as jnp
from jax import lax
from jax.experimental import pallas as pl
from jax.experimental.pallas import tpu as pltpu


# Tile sizes: (8,128)-aligned, sized so double-buffered x/y/out tiles stay well
# inside the default scoped VMEM on every generation (v5e 16 MiB, v6e/v7x 32 MiB).
_TM = 256        # output rows per tile (multiple of 8)
_TN = 1024       # output cols per tile (multiple of 128, lane dense)
_TN_EXP = 2048   # cols per tile for the elementwise exp pass


def _clip_tile(dim, tile):
    """Full extent for small dims, otherwise the (8,128)-aligned tile."""
    return dim if dim <= tile else tile


# ----------------------------------------------------------------------------
# Kernels
# ----------------------------------------------------------------------------
def _sqdist_kernel(x_ref, xx_ref, y_ref, yy_ref, out_ref):
    # (TM, D) . (TN, D)^T on the MXU, contracting the last dim of both operands
    # directly (no y transpose materialized in VMEM).
    xy = lax.dot_general(
        x_ref[...], y_ref[...],
        dimension_numbers=(((1,), (1,)), ((), ())),
        preferred_element_type=jnp.float32,
    )
    out_ref[...] = xx_ref[...] + yy_ref[...] - 2.0 * xy


def _make_fused_rbf_kernel(gamma):
    # gamma is a static Python float (fixed-bandwidth path) -> baked in as a
    # constant; fuses the exp epilogue and drops a full HBM round trip.
    def kernel(x_ref, xx_ref, y_ref, yy_ref, out_ref):
        xy = lax.dot_general(
            x_ref[...], y_ref[...],
            dimension_numbers=(((1,), (1,)), ((), ())),
            preferred_element_type=jnp.float32,
        )
        d = xx_ref[...] + yy_ref[...] - 2.0 * xy
        out_ref[...] = jnp.exp(-gamma * d)
    return kernel


def _exp_kernel(gamma_ref, d_ref, out_ref):
    # gamma is a data-dependent scalar (median path) read from SMEM.
    out_ref[...] = jnp.exp(-gamma_ref[0] * d_ref[...])


# ----------------------------------------------------------------------------
# pallas_call wrappers
# ----------------------------------------------------------------------------
def _dist_grid_and_specs(n, m, d):
    tm = _clip_tile(n, _TM)
    tn = _clip_tile(m, _TN)
    grid = (pl.cdiv(n, tm), pl.cdiv(m, tn))
    in_specs = [
        pl.BlockSpec((tm, d), lambda i, j: (i, 0)),   # x tile
        pl.BlockSpec((tm, 1), lambda i, j: (i, 0)),   # ||x||^2 column
        pl.BlockSpec((tn, d), lambda i, j: (j, 0)),   # y tile
        pl.BlockSpec((1, tn), lambda i, j: (0, j)),   # ||y||^2 row
    ]
    out_specs = pl.BlockSpec((tm, tn), lambda i, j: (i, j))
    return grid, in_specs, out_specs


def _row_norms(x, y):
    # O(N*D) / O(M*D): negligible next to the O(N*M) kernels; plain JAX is fine.
    xx = jnp.sum(x * x, axis=1, keepdims=True)          # (N, 1)
    yy = jnp.sum(y * y, axis=1)[None, :]                 # (1, M)
    return xx, yy


def squared_norm_pallas(x, y):
    """Pairwise squared distances dnorm2 (N, M) via a tiled Pallas kernel."""
    n, d = x.shape
    m, _ = y.shape
    xx, yy = _row_norms(x, y)
    grid, in_specs, out_specs = _dist_grid_and_specs(n, m, d)
    return pl.pallas_call(
        _sqdist_kernel,
        out_shape=jax.ShapeDtypeStruct((n, m), jnp.float32),
        grid=grid,
        in_specs=in_specs,
        out_specs=out_specs,
        compiler_params=pltpu.CompilerParams(
            dimension_semantics=("parallel", "parallel")),
    )(x, xx, y, yy)


def _rbf_fixed_bandwidth(x, y, gamma):
    """Fused distance + exp kernel (single HBM pass); gamma is a Python float."""
    n, d = x.shape
    m, _ = y.shape
    xx, yy = _row_norms(x, y)
    grid, in_specs, out_specs = _dist_grid_and_specs(n, m, d)
    return pl.pallas_call(
        _make_fused_rbf_kernel(gamma),
        out_shape=jax.ShapeDtypeStruct((n, m), jnp.float32),
        grid=grid,
        in_specs=in_specs,
        out_specs=out_specs,
        compiler_params=pltpu.CompilerParams(
            dimension_semantics=("parallel", "parallel")),
    )(x, xx, y, yy)


def _exp_pallas(gamma_arr, dnorm2):
    """Tiled elementwise exp(-gamma * dnorm2); aliases dnorm2's HBM buffer."""
    n, m = dnorm2.shape
    tm = _clip_tile(n, _TM)
    tn = _clip_tile(m, _TN_EXP)
    grid = (pl.cdiv(n, tm), pl.cdiv(m, tn))
    return pl.pallas_call(
        _exp_kernel,
        out_shape=jax.ShapeDtypeStruct((n, m), jnp.float32),
        grid=grid,
        in_specs=[
            pl.BlockSpec(memory_space=pltpu.MemorySpace.SMEM),    # gamma scalar
            pl.BlockSpec((tm, tn), lambda i, j: (i, j)),
        ],
        out_specs=pl.BlockSpec((tm, tn), lambda i, j: (i, j)),
        input_output_aliases={1: 0},   # dnorm2 is dead after the exp; reuse it
        compiler_params=pltpu.CompilerParams(
            dimension_semantics=("parallel", "parallel")),
    )(gamma_arr, dnorm2)


# ----------------------------------------------------------------------------
# Forward (matches RBFKernel.forward semantics)
# ----------------------------------------------------------------------------
@functools.partial(jax.jit, static_argnames=("bandwidth",))
def rbf_kernel_forward(x, y, bandwidth=None):
    x = x.astype(jnp.float32)
    y = y.astype(jnp.float32)
    n = x.shape[0]

    if bandwidth is None:
        # Median heuristic needs the full dnorm2 matrix (mirrors the np.median
        # path in the PyTorch module).
        # TODO(synk): at large N*M the exact median (XLA sort) dominates both
        # Pallas kernels; an approximate/sampled median would enable full
        # fusion of the exp epilogue here as well.
        dnorm2 = squared_norm_pallas(x, y)
        h = jnp.median(dnorm2) / (2.0 * jnp.log(jnp.float32(n + 1)))
        bw = jnp.sqrt(h)
        gamma = 1.0 / (1e-8 + 2.0 * bw * bw)
        gamma_arr = jnp.reshape(gamma, (1,)).astype(jnp.float32)
        return _exp_pallas(gamma_arr, dnorm2)
    else:
        # bandwidth is static -> gamma is a compile-time constant; fuse exp.
        gamma = 1.0 / (1e-8 + 2.0 * float(bandwidth) ** 2)
        return _rbf_fixed_bandwidth(x, y, gamma)


# ----------------------------------------------------------------------------
# Reference + test
# ----------------------------------------------------------------------------
def _reference(x, y, bandwidth=None):
    x = x.astype(jnp.float32)
    y = y.astype(jnp.float32)
    xy = x @ y.T
    xx = jnp.sum(x * x, axis=1)
    yy = jnp.sum(y * y, axis=1)
    dnorm2 = -2.0 * xy + xx[:, None] + yy[None, :]
    if bandwidth is None:
        h = jnp.median(dnorm2) / (2.0 * jnp.log(jnp.float32(x.shape[0] + 1)))
        bw = jnp.sqrt(h)
    else:
        bw = jnp.float32(bandwidth)
    gamma = 1.0 / (1e-8 + 2.0 * bw ** 2)
    return jnp.exp(-gamma * dnorm2)


if __name__ == "__main__":
    key = jax.random.PRNGKey(0)
    kx, ky = jax.random.split(key)

    # Small shapes consistent with the module (rows = samples, cols = features).
    N, M, D = 16, 16, 32
    x = jax.random.normal(kx, (N, D), dtype=jnp.float32)
    y = jax.random.normal(ky, (M, D), dtype=jnp.float32)

    k_med = jax.block_until_ready(rbf_kernel_forward(x, y))
    assert k_med.shape == (N, M)
    assert jnp.allclose(k_med, _reference(x, y), atol=1e-5, rtol=1e-5)

    k_fixed = jax.block_until_ready(rbf_kernel_forward(x, y, bandwidth=1.5))
    assert jnp.allclose(k_fixed, _reference(x, y, bandwidth=1.5),
                        atol=1e-5, rtol=1e-5)

    # Larger, non-divisible shapes to exercise the multi-tile grid + edge blocks.
    N2, M2, D2 = 384, 1280, 32
    x2 = jax.random.normal(kx, (N2, D2), dtype=jnp.float32)
    y2 = jax.random.normal(ky, (M2, D2), dtype=jnp.float32)

    k2_fixed = jax.block_until_ready(rbf_kernel_forward(x2, y2, bandwidth=2.0))
    assert jnp.allclose(k2_fixed, _reference(x2, y2, bandwidth=2.0),
                        atol=1e-5, rtol=1e-5)

    k2_med = jax.block_until_ready(rbf_kernel_forward(x2, y2))
    assert jnp.allclose(k2_med, _reference(x2, y2), atol=1e-4, rtol=1e-4)

    print("KERNEL_OK")
</pallas_src>

<mosaic_0001>
module attributes {stable_mosaic.version = 11 : i64} {
  func.func @_sqdist_kernel(%arg0: i32, %arg1: i32, %arg2: memref<16x32xf32, #tpu.memory_space<vmem>>, %arg3: memref<16x1xf32, #tpu.memory_space<vmem>>, %arg4: memref<16x32xf32, #tpu.memory_space<vmem>>, %arg5: memref<1x16xf32, #tpu.memory_space<vmem>>, %arg6: memref<16x16xf32, #tpu.memory_space<vmem>>) attributes {dimension_semantics = [#tpu.dimension_semantics<parallel>, #tpu.dimension_semantics<parallel>], iteration_bounds = array<i64: 1, 1>, scalar_prefetch = 0 : i64, scratch_operands = 0 : i64, tpu.core_type = #tpu.core_type<tc>, window_params = [{transform_indices = @transform_0, window_bounds = array<i64: 16, 32>}, {transform_indices = @transform_1, window_bounds = array<i64: 16, 1>}, {transform_indices = @transform_2, window_bounds = array<i64: 16, 32>}, {transform_indices = @transform_3, window_bounds = array<i64: 1, 16>}, {transform_indices = @transform_4, window_bounds = array<i64: 16, 16>}]} {
    %c0 = arith.constant 0 : index
    %c0_0 = arith.constant 0 : index
    %0 = vector.load %arg2[%c0, %c0_0] : memref<16x32xf32, #tpu.memory_space<vmem>>, vector<16x32xf32>
    %c0_1 = arith.constant 0 : index
    %c0_2 = arith.constant 0 : index
    %1 = vector.load %arg4[%c0_1, %c0_2] : memref<16x32xf32, #tpu.memory_space<vmem>>, vector<16x32xf32>
    %cst = arith.constant dense<0.000000e+00> : vector<16x16xf32>
    %2 = tpu.matmul %0, %1, %cst {dimension_numbers = #tpu.dot_dimension_numbers<[1], [1], [0], [0], [0, 0, 1, 0], [], []>} : vector<16x32xf32>, vector<16x32xf32>, vector<16x16xf32> -> vector<16x16xf32>
    %c0_3 = arith.constant 0 : index
    %c0_4 = arith.constant 0 : index
    %3 = vector.load %arg3[%c0_3, %c0_4] : memref<16x1xf32, #tpu.memory_space<vmem>>, vector<16x1xf32>
    %c0_5 = arith.constant 0 : index
    %c0_6 = arith.constant 0 : index
    %4 = vector.load %arg5[%c0_5, %c0_6] : memref<1x16xf32, #tpu.memory_space<vmem>>, vector<1x16xf32>
    %5 = vector.broadcast %3 : vector<16x1xf32> to vector<16x16xf32>
    %6 = vector.broadcast %4 : vector<1x16xf32> to vector<16x16xf32>
    %7 = arith.addf %5, %6 : vector<16x16xf32>
    %cst_7 = arith.constant 2.000000e+00 : f32
    %8 = vector.broadcast %cst_7 : f32 to vector<16x16xf32>
    %9 = arith.mulf %8, %2 : vector<16x16xf32>
    %10 = arith.subf %7, %9 : vector<16x16xf32>
    %c0_8 = arith.constant 0 : index
    %c0_9 = arith.constant 0 : index
    %11 = vector.load %arg6[%c0_8, %c0_9] : memref<16x16xf32, #tpu.memory_space<vmem>>, vector<16x16xf32>
    tpu.vector_store %arg6[%c0_8, %c0_9], %10 {strides = array<i32>} : memref<16x16xf32, #tpu.memory_space<vmem>>, vector<16x16xf32>,
    return
  }
  func.func @transform_0(%arg0: i32, %arg1: i32) -> (i32, i32) {
    %c0_i32 = arith.constant 0 : i32
    %c0_i32_0 = arith.constant 0 : i32
    return %arg0, %c0_i32 : i32, i32
  }
  func.func @transform_1(%arg0: i32, %arg1: i32) -> (i32, i32) {
    %c0_i32 = arith.constant 0 : i32
    %c0_i32_0 = arith.constant 0 : i32
    return %arg0, %c0_i32 : i32, i32
  }
  func.func @transform_2(%arg0: i32, %arg1: i32) -> (i32, i32) {
    %c0_i32 = arith.constant 0 : i32
    %c0_i32_0 = arith.constant 0 : i32
    return %arg1, %c0_i32 : i32, i32
  }
  func.func @transform_3(%arg0: i32, %arg1: i32) -> (i32, i32) {
    %c0_i32 = arith.constant 0 : i32
    %c0_i32_0 = arith.constant 0 : i32
    return %c0_i32, %arg1 : i32, i32
  }
  func.func @transform_4(%arg0: i32, %arg1: i32) -> (i32, i32) {
    %c0_i32 = arith.constant 0 : i32
    return %arg0, %arg1 : i32, i32
  }
}

module attributes {stable_mosaic.version = 11 : i64} {
  func.func @_exp_kernel(%arg0: i32, %arg1: i32, %arg2: memref<1xf32, #tpu.memory_space<smem>>, %arg3: memref<16x16xf32, #tpu.memory_space<vmem>>, %arg4: memref<16x16xf32, #tpu.memory_space<vmem>>) attributes {dimension_semantics = [#tpu.dimension_semantics<parallel>, #tpu.dimension_semantics<parallel>], iteration_bounds = array<i64: 1, 1>, scalar_prefetch = 0 : i64, scratch_operands = 0 : i64, tpu.core_type = #tpu.core_type<tc>, window_params = [{transform_indices = @transform_0, window_bounds = array<i64: 1>}, {transform_indices = @transform_1, window_bounds = array<i64: 16, 16>}, {transform_indices = @transform_2, window_bounds = array<i64: 16, 16>}]} {
    %c0 = arith.constant 0 : index
    %0 = memref.load %arg2[%c0] : memref<1xf32, #tpu.memory_space<smem>>
    %cst = arith.constant 0.000000e+00 : f32
    %1 = arith.subf %cst, %0 : f32
    %c0_0 = arith.constant 0 : index
    %c0_1 = arith.constant 0 : index
    %2 = vector.load %arg3[%c0_0, %c0_1] : memref<16x16xf32, #tpu.memory_space<vmem>>, vector<16x16xf32>
    %3 = vector.broadcast %1 : f32 to vector<16x16xf32>
    %4 = arith.mulf %3, %2 : vector<16x16xf32>
    %5 = math.exp %4 : vector<16x16xf32>
    %c0_2 = arith.constant 0 : index
    %c0_3 = arith.constant 0 : index
    %6 = vector.load %arg4[%c0_2, %c0_3] : memref<16x16xf32, #tpu.memory_space<vmem>>, vector<16x16xf32>
    tpu.vector_store %arg4[%c0_2, %c0_3], %5 {strides = array<i32>} : memref<16x16xf32, #tpu.memory_space<vmem>>, vector<16x16xf32>,
    return
  }
  func.func @transform_0(%arg0: i32, %arg1: i32) -> i32 {
    %c0_i32 = arith.constant 0 : i32
    %c0_i32_0 = arith.constant 0 : i32
    return %c0_i32 : i32
  }
  func.func @transform_1(%arg0: i32, %arg1: i32) -> (i32, i32) {
    %c0_i32 = arith.constant 0 : i32
    return %arg0, %arg1 : i32, i32
  }
  func.func @transform_2(%arg0: i32, %arg1: i32) -> (i32, i32) {
    %c0_i32 = arith.constant 0 : i32
    return %arg0, %arg1 : i32, i32
  }
}

</mosaic_0001>

<llo_original>
// kernel: rbf_kernel_forward.2
$region0: #{rbf_kernel_forward.2}
  #allocation0 [shape = 'u32[]', space=smem, size = 0x4, offset = 0x4, fixed_abs, tag = 'smem constant byte address 0x4 - core index']
  #allocation1 [shape = 'u32[144,128]{1,0:T(1,128)}', space=vmem, size = 0x12000, scoped, tag = 'internal scratch']
  %s0 = inlined_call_operand.vmem [shape: f32[16,32], index: 0, kind: input, shape index: {}]
  %s1 = inlined_call_operand.vmem [shape: f32[16,1], index: 1, kind: input, shape index: {}]
  %s2 = inlined_call_operand.vmem [shape: f32[16,32], index: 2, kind: input, shape index: {}]
  %s3 = inlined_call_operand.vmem [shape: f32[1,16], index: 3, kind: input, shape index: {}]
  %s4 = inlined_call_operand.vmem [shape: f32[16,16], index: 4, kind: output, shape index: {}]
  %s5 = sld [smem:[#allocation0]]
  $region26: #{rbf_kernel_forward.2} parent=0
    _
  %s7 = ssub.s32 1, %s5
  %s8 = scalar_select 0, %s7, %s5
  // Predicated region
  $region2: #{rbf_kernel_forward.2} parent=0 // pred_check
    _
  $region3: #{rbf_kernel_forward.2} parent=0 // pred_check_branch
    %10 = sbr.rel (0) target = $region5
  $region4: #{rbf_kernel_forward.2} parent=0 // pred_region
    _
  $region5: #{rbf_kernel_forward.2} parent=0 // pred_fallthru
    _
  // Predicated region
  $region6: #{rbf_kernel_forward.2} parent=0 // pred_check
    _
  $region7: #{rbf_kernel_forward.2} parent=0 // pred_check_branch
    %12 = sbr.rel (0) target = $region9
  $region8: #{rbf_kernel_forward.2} parent=0 // pred_region
    _
  $region9: #{rbf_kernel_forward.2} parent=0 // pred_fallthru
    _
  // Predicated region
  $region10: #{rbf_kernel_forward.2} parent=0 // pred_check
    _
  $region11: #{rbf_kernel_forward.2} parent=0 // pred_check_branch
    %14 = sbr.rel (0) target = $region13
  $region12: #{rbf_kernel_forward.2} parent=0 // pred_region
    _
  $region13: #{rbf_kernel_forward.2} parent=0 // pred_fallthru
    _
  // Predicated region
  $region14: #{rbf_kernel_forward.2} parent=0 // pred_check
    _
  $region15: #{rbf_kernel_forward.2} parent=0 // pred_check_branch
    %16 = sbr.rel (0) target = $region17
  $region16: #{rbf_kernel_forward.2} parent=0 // pred_region
    _
  $region17: #{rbf_kernel_forward.2} parent=0 // pred_fallthru
    _
  %v17 = vld [vmem:[%s0] sm:$0xff]
  %v18 = vld [vmem:[%s0 + $0x8] sm:$0xff]
  %v19 = vld [vmem:[%s2] sm:$0xff]
  %v20 = vld [vmem:[%s2 + $0x8] sm:$0xff]
  %vm21 = vcmask 261120
  %v23 = vsel %vm21, %v17, 0
  %v26 = vsel %vm21, %v18, 0
  %v29 = vsel %vm21, %v19, 0
  %v32 = vsel %vm21, %v20, 0
  %34 = vmatprep.subr.mxu0 0.0
  %35 = vmatpush1.xpose.msra.mxu0 0.0
  %36 = vmatprep.subr.mxu0 0.0
  %37 = vmatpush1.xpose.msra.mxu0 0.0
  %38 = vmatprep.subr.mxu0 0.0
  %39 = vmatpush1.xpose.msra.mxu0 0.0
  %40 = vmatprep.subr.mxu0 0.0
  %41 = vmatpush1.xpose.msra.mxu0 0.0
  %42 = vmatprep.subr.mxu0 0.0
  %43 = vmatpush1.xpose.msra.mxu0 0.0
  %44 = vmatprep.subr.mxu0 0.0
  %45 = vmatpush1.xpose.msra.mxu0 0.0
  %46 = vmatprep.subr.mxu0 0.0
  %47 = vmatpush1.xpose.msra.mxu0 0.0
  %48 = vmatprep.subr.mxu0 0.0
  %49 = vmatpush1.xpose.msra.mxu0 0.0
  %50 = vmatprep.subr.mxu0 0.0
  %51 = vmatpush1.xpose.msra.mxu0 0.0
  %52 = vmatprep.subr.mxu0 0.0
  %53 = vmatpush1.xpose.msra.mxu0 0.0
  %54 = vmatprep.subr.mxu0 0.0
  %55 = vmatpush1.xpose.msra.mxu0 0.0
  %56 = vmatprep.subr.mxu0 0.0
  %57 = vmatpush1.xpose.msra.mxu0 0.0
  %58 = vmatprep.subr.mxu0 0.0
  %59 = vmatpush1.xpose.msra.mxu0 0.0
  %60 = vmatprep.subr.mxu0 0.0
  %61 = vmatpush1.xpose.msra.mxu0 0.0
  %62 = vmatprep.subr.mxu0 0.0
  %63 = vmatpush1.xpose.msra.mxu0 %v32
  %64 = vmatprep.subr.mxu0 0.0
  %65 = vmatpush1.xpose.msra.mxu0 %v29
  %66 = vmatprep.subr.mxu0 0.0
  %67 = vmatpush2.xpose.msra.mxu0 0.0
  %68 = vmatprep.subr.mxu0 0.0
  %69 = vmatpush2.xpose.msra.mxu0 0.0
  %70 = vmatprep.subr.mxu0 0.0
  %71 = vmatpush2.xpose.msra.mxu0 0.0
  %72 = vmatprep.subr.mxu0 0.0
  %73 = vmatpush2.xpose.msra.mxu0 0.0
  %74 = vmatprep.subr.mxu0 0.0
  %75 = vmatpush2.xpose.msra.mxu0 0.0
  %76 = vmatprep.subr.mxu0 0.0
  %77 = vmatpush2.xpose.msra.mxu0 0.0
  %78 = vmatprep.subr.mxu0 0.0
  %79 = vmatpush2.xpose.msra.mxu0 0.0
  %80 = vmatprep.subr.mxu0 0.0
  %81 = vmatpush2.xpose.msra.mxu0 0.0
  %82 = vmatprep.subr.mxu0 0.0
  %83 = vmatpush2.xpose.msra.mxu0 0.0
  %84 = vmatprep.subr.mxu0 0.0
  %85 = vmatpush2.xpose.msra.mxu0 0.0
  %86 = vmatprep.subr.mxu0 0.0
  %87 = vmatpush2.xpose.msra.mxu0 0.0
  %88 = vmatprep.subr.mxu0 0.0
  %89 = vmatpush2.xpose.msra.mxu0 0.0
  %90 = vmatprep.subr.mxu0 0.0
  %91 = vmatpush2.xpose.msra.mxu0 0.0
  %92 = vmatprep.subr.mxu0 0.0
  %93 = vmatpush2.xpose.msra.mxu0 0.0
  %94 = vmatprep.subr.mxu0 0.0
  %95 = vmatpush2.xpose.msra.mxu0 0.0
  %96 = vmatprep.subr.mxu0 0.0
  %97 = vmatpush2.xpose.msra.mxu0 0.0
  %98 = vmatprep.mubr.f32.mxu0 0.0
  %99 = vmatmul.mubr.f32.gmra.mxu0 %v23
  %v100 = vpop.f32.mrf.mxu0
  %v101 = vadd.f32 0.0, %v100
  %v102 = vpop.f32.mrf.mxu0
  %103 = vmatprep.mubr.f32.mxu0 0.0
  %104 = vmatmul.mubr.f32.gmra.mxu0 %v26
  %v105 = vpop.f32.mrf.mxu0
  %v106 = vadd.f32 0.0, %v105
  %v107 = vpop.f32.mrf.mxu0
  %108 = vdwg.mxu0
  %v109 = vld [vmem:[%s1] sm:$0xff]
  %v110 = vld [vmem:[%s1 + $0x8] sm:$0xff]
  %v111 = vld [vmem:[%s3] sm:$0x1]
  %113 = vset.pattern.permute.xlu0 0
  %114 = vperm.xlu0 %113, %v109
  %v115 = vpop.permute.xlu0 %114
  %118 = vset.pattern.permute.xlu0 0
  %119 = vperm.xlu0 %118, %v110
  %v120 = vpop.permute.xlu0 %119
  %v123 = vlaneseq
  %v124 = vshrl.u32 %v123, 7
  %v125 = vsub.s32 0, %v124
  %v126 = vrot.slane %v111, %v125
  %v128 = vadd.f32 %v115, %v126
  %v129 = vadd.f32 %v120, %v126
  %v130 = vmul.f32 %v101, 2.0
  %v131 = vmul.f32 %v106, 2.0
  %v132 = vsub.f32 %v128, %v130
  %v133 = vsub.f32 %v129, %v131
  %vm134 = vcmask 130048
  %135 = vst.msk [vmem:[%s4] sm:$0xff] %vm134, %v132
  %136 = vst.msk [vmem:[%s4 + $0x8] sm:$0xff] %vm134, %v133
  // Predicated region
  $region18: #{rbf_kernel_forward.2} parent=0 // pred_check
    _
  $region19: #{rbf_kernel_forward.2} parent=0 // pred_check_branch
    %138 = sbr.rel (0) target = $region21
  $region20: #{rbf_kernel_forward.2} parent=0 // pred_region
    _
  $region21: #{rbf_kernel_forward.2} parent=0 // pred_fallthru
    _
  // Predicated region
  $region22: #{rbf_kernel_forward.2} parent=0 // pred_check
    _
  $region23: #{rbf_kernel_forward.2} parent=0 // pred_check_branch
    %140 = sbr.rel (0) target = $region25
  $region24: #{rbf_kernel_forward.2} parent=0 // pred_region
    _
  $region25: #{rbf_kernel_forward.2} parent=0 // pred_fallthru
    _

// kernel: rbf_kernel_forward.3
$region0: #{rbf_kernel_forward.3}
  #allocation0 [shape = 'u32[]', space=smem, size = 0x4, offset = 0x4, fixed_abs, tag = 'smem constant byte address 0x4 - core index']
  #allocation1 [shape = 'u32[144,128]{1,0:T(1,128)}', space=vmem, size = 0x12000, scoped, tag = 'internal scratch']
  #allocation2 [shape = 'f32[1]{0:T(128)S(6)}', space=smem, size = 0x200, scoped, tag = 'scoped memory for rbf_kernel_forward.3']
  %s0 = inlined_call_operand.<no memory space> [shape: f32[1], index: 0, kind: input, shape index: {}]
  %s1 = inlined_call_operand.hbm [shape: f32[16,16], index: 1, kind: input, shape index: {}, may-alias: {1,2}]
  %s2 = inlined_call_operand.hbm [shape: f32[16,16], index: 2, kind: output, shape index: {}, may-alias: {1,2}]
  %s3 = sld [smem:[#allocation0]]
  $region22: #{rbf_kernel_forward.3} parent=0
    _
  %s5 = ssub.s32 1, %s3
  %s6 = scalar_select 0, %s5, %s3
  %7 = sst [smem:[#allocation2]] %s0
  $region1: #{rbf_kernel_forward.3} parent=0
    #allocation3 [shape = 'u8[8192]{0}', space=vmem, size = 0x2000, scoped, tag = 'input window, operand 1, single buffered']
    #allocation4 [shape = 's32[1]{0}', space=sflag, size = 0x4, scoped, tag = 'scoped memory for rbf_kernel_forward.3']
    #allocation5 [shape = 's32[1]{0}', space=sflag, size = 0x4, scoped, tag = 'scoped memory for rbf_kernel_forward.3']
    #allocation6 [shape = 'u8[8192]{0}', space=vmem, size = 0x2000, scoped, tag = 'output window, operand 0, single buffered']
    %8 = vsyncpa [#allocation4], 0
    %9 = vsyncpa [#allocation5], 0
    // Predicated region
    $region2: #{rbf_kernel_forward.3} parent=1 // pred_check
      _
    $region3: #{rbf_kernel_forward.3} parent=1 // pred_check_branch
      %11 = sbr.rel (0) target = $region5
    $region4: #{rbf_kernel_forward.3} parent=1 // pred_region
      _
    $region5: #{rbf_kernel_forward.3} parent=1 // pred_fallthru
      _
    // Predicated region
    $region6: #{rbf_kernel_forward.3} parent=1 // pred_check
      _
    $region7: #{rbf_kernel_forward.3} parent=1 // pred_check_branch
      %13 = sbr.rel (0) target = $region9
    $region8: #{rbf_kernel_forward.3} parent=1 // pred_region
      %s15 = ssub.s32 256, 256
      %16 = vsyncadd [#allocation4], %s15
      %s17 = sshll.u32 [#allocation3], 4
      %s18 = int_to_ptr.vmem [resolvable:$true] %s17
      %23 = dma.hbm_to_vmem [thread:$0]  %s1, 256, %s18, [#allocation4], 128, 128, 8
    $region9: #{rbf_kernel_forward.3} parent=1 // pred_fallthru
      _
    // Predicated region
    $region10: #{rbf_kernel_forward.3} parent=1 // pred_check
      _
    $region11: #{rbf_kernel_forward.3} parent=1 // pred_check_branch
      %25 = sbr.rel (0) target = $region13
    $region12: #{rbf_kernel_forward.3} parent=1 // pred_region
      %26 = dma.done [#allocation4], 256
    $region13: #{rbf_kernel_forward.3} parent=1 // pred_fallthru
      _
    %s27 = sld [smem:[#allocation2]]
    %s28 = ssub.f32 0.0, %s27
    %v29 = vld [vmem:[#allocation3] sm:$0xff]
    %v30 = vld [vmem:[#allocation3 + $0x8] sm:$0xff]
    %v31 = vstv %s28
    %v32 = vmul.f32 %v31, %v29
    %v33 = vmul.f32 %v31, %v30
    %v34 = vmul.f32 %v32, 1.442695
    %v35 = vpow.pop %v34
    %v36 = vmul.f32 %v33, 1.442695
    %v37 = vpow.pop %v36
    %vm38 = vcmask 130048
    %39 = vst.msk [vmem:[#allocation6] sm:$0xff] %vm38, %v35
    %40 = vst.msk [vmem:[#allocation6 + $0x8] sm:$0xff] %vm38, %v37
    // Predicated region
    $region14: #{rbf_kernel_forward.3} parent=1 // pred_check
      _
    $region15: #{rbf_kernel_forward.3} parent=1 // pred_check_branch
      %42 = sbr.rel (0) target = $region17
    $region16: #{rbf_kernel_forward.3} parent=1 // pred_region
      %s44 = ssub.s32 256, 256
      %45 = vsyncadd [#allocation5], %s44
      %s46 = sshll.u32 [#allocation6], 4
      %s47 = int_to_ptr.vmem [resolvable:$true] %s46
      %52 = dma.vmem_to_hbm [thread:$0]  %s47, 256, %s2, [#allocation5], 128, 128, 8
    $region17: #{rbf_kernel_forward.3} parent=1 // pred_fallthru
      _
    // Predicated region
    $region18: #{rbf_kernel_forward.3} parent=1 // pred_check
      _
    $region19: #{rbf_kernel_forward.3} parent=1 // pred_check_branch
      %54 = sbr.rel (0) target = $region21
    $region20: #{rbf_kernel_forward.3} parent=1 // pred_region
      %55 = dma.done [#allocation5], 256
    $region21: #{rbf_kernel_forward.3} parent=1 // pred_fallthru
      _
    %56 = vsyncpa [#allocation4], 1
    %57 = vsyncpa [#allocation5], 1

</llo_original>
